<compile_context>
chip_gen: v7x
topology: tpu7x:2x2x1
jax: 0.10.0
libtpu: 0.0.40
codegen_flags: <defaults>
</compile_context>

<pallas_src>
import jax
import jax.numpy as jnp
from jax.experimental import pallas as pl
from jax.experimental.pallas import tpu as pltpu


def _round_up(x, m):
    return (x + m - 1) // m * m


def _classifiers_kernel(x_ref, w1_ref, b1_ref, w2_ref, b2_ref, w3_ref, b3_ref, o_ref):
    # Stage 1: (BN folded) Linear -> ReLU          [Dropout = identity in eval]
    h = jnp.dot(x_ref[...].astype(jnp.bfloat16), w1_ref[...],
                preferred_element_type=jnp.float32) + b1_ref[...]
    h = jnp.maximum(h, 0.0)

    # Stage 2: (BN folded) Linear -> ReLU
    h = jnp.dot(h.astype(jnp.bfloat16), w2_ref[...],
                preferred_element_type=jnp.float32) + b2_ref[...]
    h = jnp.maximum(h, 0.0)

    # Stage 3: (BN folded) Linear (logits, no activation)
    out = jnp.dot(h.astype(jnp.bfloat16), w3_ref[...],
                  preferred_element_type=jnp.float32) + b3_ref[...]
    o_ref[...] = out.astype(o_ref.dtype)


def classifiers_forward(x, params, *, tile_m=1024):
    """x: (B, in_features) float32.
    params: dict of BN-folded, pre-transposed (in, out) weights and (1, out) biases."""
    B, f1 = x.shape
    n_classes = params["w3"].shape[1]

    # Pre-cast weights to bf16 for native MXU passes; biases stay f32.
    w1 = params["w1"].astype(jnp.bfloat16)
    w2 = params["w2"].astype(jnp.bfloat16)
    w3 = params["w3"].astype(jnp.bfloat16)
    b1, b2, b3 = params["b1"], params["b2"], params["b3"]

    # Batch tile: multiple of 8 sublanes, large enough to amortize per-step
    # overhead, capped at the padded batch so small batches compile to grid=(1,).
    tm = min(tile_m, _round_up(B, 8))
    b_pad = _round_up(B, tm)
    if b_pad != B:
        x = jnp.pad(x, ((0, b_pad - B), (0, 0)))

    grid = (b_pad // tm,)

    out = pl.pallas_call(
        _classifiers_kernel,
        out_shape=jax.ShapeDtypeStruct((b_pad, n_classes), jnp.float32),
        grid=grid,
        in_specs=[
            pl.BlockSpec((tm, f1), lambda i: (i, 0)),       # x: streamed per batch tile
            pl.BlockSpec(w1.shape, lambda i: (0, 0)),       # weights/biases: resident
            pl.BlockSpec(b1.shape, lambda i: (0, 0)),
            pl.BlockSpec(w2.shape, lambda i: (0, 0)),
            pl.BlockSpec(b2.shape, lambda i: (0, 0)),
            pl.BlockSpec(w3.shape, lambda i: (0, 0)),
            pl.BlockSpec(b3.shape, lambda i: (0, 0)),
        ],
        out_specs=pl.BlockSpec((tm, n_classes), lambda i: (i, 0)),
        compiler_params=pltpu.CompilerParams(
            dimension_semantics=("parallel",)),
    )(x, w1, b1, w2, b2, w3, b3)

    return out[:B]


def make_params(key, in_features, n_classes, eps=1e-5):
    """Deterministic synthetic parameters matching the PyTorch module's shapes,
    with eval-mode BatchNorm folded into the linear weights/biases."""
    f1 = in_features
    f2 = in_features // 2
    f3 = in_features // 4

    keys = jax.random.split(key, 18)
    ki = iter(keys)

    def bn_fold(c):
        gamma = 1.0 + 0.1 * jax.random.normal(next(ki), (c,), jnp.float32)
        beta = 0.1 * jax.random.normal(next(ki), (c,), jnp.float32)
        running_mean = 0.05 * jax.random.normal(next(ki), (c,), jnp.float32)
        running_var = 1.0 + 0.1 * jax.random.uniform(next(ki), (c,), jnp.float32)
        scale = gamma / jnp.sqrt(running_var + eps)
        shift = beta - running_mean * scale
        return scale, shift

    def linear(fan_in, fan_out):
        # PyTorch nn.Linear default init: U(-1/sqrt(fan_in), 1/sqrt(fan_in))
        bound = float(fan_in) ** -0.5
        w = jax.random.uniform(next(ki), (fan_out, fan_in), jnp.float32, -bound, bound)
        b = jax.random.uniform(next(ki), (fan_out,), jnp.float32, -bound, bound)
        return w.T, b  # pre-transposed to (in, out)

    def fold(scale, shift, w, b):
        # y = ((x*scale + shift) @ W + b) = x @ (scale[:,None]*W) + (shift @ W + b)
        w_f = scale.reshape(-1, 1) * w
        b_f = shift @ w + b
        return w_f, b_f.reshape(1, -1)

    s1, t1 = bn_fold(f1)
    w1, b1 = linear(f1, f2)
    w1, b1 = fold(s1, t1, w1, b1)

    s2, t2 = bn_fold(f2)
    w2, b2 = linear(f2, f3)
    w2, b2 = fold(s2, t2, w2, b2)

    s3, t3 = bn_fold(f3)
    w3, b3 = linear(f3, n_classes)
    w3, b3 = fold(s3, t3, w3, b3)

    return dict(w1=w1, b1=b1, w2=w2, b2=b2, w3=w3, b3=b3)


def reference_forward(x, p):
    """Pure-JAX f32 reference of the same eval-mode forward."""
    h = jnp.maximum(x @ p["w1"] + p["b1"], 0.0)
    h = jnp.maximum(h @ p["w2"] + p["b2"], 0.0)
    return h @ p["w3"] + p["b3"]


if __name__ == "__main__":
    in_features = 32
    n_classes = 8
    batch = 8

    key = jax.random.PRNGKey(0)
    kx, kp = jax.random.split(key)
    x = jax.random.normal(kx, (batch, in_features), jnp.float32)
    params = make_params(kp, in_features, n_classes)

    out = classifiers_forward(x, params)
    out = jax.block_until_ready(out)

    ref = reference_forward(x, params)
    assert out.shape == (batch, n_classes)
    # bf16 matmul inputs (f32 accumulate) -> loose tolerance vs the f32 reference.
    assert jnp.allclose(out, ref, atol=5e-2, rtol=5e-2), "mismatch vs JAX reference"

    print("KERNEL_OK")
</pallas_src>

<mosaic_0001>
module attributes {stable_mosaic.version = 11 : i64} {
  func.func @_classifiers_kernel(%arg0: i32, %arg1: memref<8x32xf32, #tpu.memory_space<vmem>>, %arg2: memref<32x16xbf16, #tpu.memory_space<vmem>>, %arg3: memref<1x16xf32, #tpu.memory_space<vmem>>, %arg4: memref<16x8xbf16, #tpu.memory_space<vmem>>, %arg5: memref<1x8xf32, #tpu.memory_space<vmem>>, %arg6: memref<8x8xbf16, #tpu.memory_space<vmem>>, %arg7: memref<1x8xf32, #tpu.memory_space<vmem>>, %arg8: memref<8x8xf32, #tpu.memory_space<vmem>>) attributes {dimension_semantics = [#tpu.dimension_semantics<parallel>], iteration_bounds = array<i64: 1>, scalar_prefetch = 0 : i64, scratch_operands = 0 : i64, tpu.core_type = #tpu.core_type<tc>, window_params = [{transform_indices = @transform_0, window_bounds = array<i64: 8, 32>}, {pipeline_mode = #tpu.pipeline_mode<synchronous>, transform_indices = @transform_1, window_bounds = array<i64: 32, 16>}, {pipeline_mode = #tpu.pipeline_mode<synchronous>, transform_indices = @transform_2, window_bounds = array<i64: 1, 16>}, {pipeline_mode = #tpu.pipeline_mode<synchronous>, transform_indices = @transform_3, window_bounds = array<i64: 16, 8>}, {pipeline_mode = #tpu.pipeline_mode<synchronous>, transform_indices = @transform_4, window_bounds = array<i64: 1, 8>}, {pipeline_mode = #tpu.pipeline_mode<synchronous>, transform_indices = @transform_5, window_bounds = array<i64: 8, 8>}, {pipeline_mode = #tpu.pipeline_mode<synchronous>, transform_indices = @transform_6, window_bounds = array<i64: 1, 8>}, {transform_indices = @transform_7, window_bounds = array<i64: 8, 8>}]} {
    %c0 = arith.constant 0 : index
    %c0_0 = arith.constant 0 : index
    %0 = vector.load %arg1[%c0, %c0_0] : memref<8x32xf32, #tpu.memory_space<vmem>>, vector<8x32xf32>
    %1 = arith.truncf %0 : vector<8x32xf32> to vector<8x32xbf16>
    %c0_1 = arith.constant 0 : index
    %c0_2 = arith.constant 0 : index
    %2 = vector.load %arg2[%c0_1, %c0_2] : memref<32x16xbf16, #tpu.memory_space<vmem>>, vector<32x16xbf16>
    %cst = arith.constant dense<0.000000e+00> : vector<8x16xf32>
    %3 = tpu.matmul %1, %2, %cst {dimension_numbers = #tpu.dot_dimension_numbers<[1], [0], [0], [1], [0, 0, 1, 1], [], []>} : vector<8x32xbf16>, vector<32x16xbf16>, vector<8x16xf32> -> vector<8x16xf32>
    %c0_3 = arith.constant 0 : index
    %c0_4 = arith.constant 0 : index
    %4 = vector.load %arg3[%c0_3, %c0_4] : memref<1x16xf32, #tpu.memory_space<vmem>>, vector<1x16xf32>
    %5 = vector.broadcast %4 : vector<1x16xf32> to vector<8x16xf32>
    %6 = arith.addf %3, %5 : vector<8x16xf32>
    %cst_5 = arith.constant 0.000000e+00 : f32
    %7 = vector.broadcast %cst_5 : f32 to vector<8x16xf32>
    %8 = arith.maximumf %6, %7 : vector<8x16xf32>
    %9 = arith.truncf %8 : vector<8x16xf32> to vector<8x16xbf16>
    %c0_6 = arith.constant 0 : index
    %c0_7 = arith.constant 0 : index
    %10 = vector.load %arg4[%c0_6, %c0_7] : memref<16x8xbf16, #tpu.memory_space<vmem>>, vector<16x8xbf16>
    %cst_8 = arith.constant dense<0.000000e+00> : vector<8x8xf32>
    %11 = tpu.matmul %9, %10, %cst_8 {dimension_numbers = #tpu.dot_dimension_numbers<[1], [0], [0], [1], [0, 0, 1, 1], [], []>} : vector<8x16xbf16>, vector<16x8xbf16>, vector<8x8xf32> -> vector<8x8xf32>
    %c0_9 = arith.constant 0 : index
    %c0_10 = arith.constant 0 : index
    %12 = vector.load %arg5[%c0_9, %c0_10] : memref<1x8xf32, #tpu.memory_space<vmem>>, vector<1x8xf32>
    %13 = vector.broadcast %12 : vector<1x8xf32> to vector<8x8xf32>
    %14 = arith.addf %11, %13 : vector<8x8xf32>
    %cst_11 = arith.constant 0.000000e+00 : f32
    %15 = vector.broadcast %cst_11 : f32 to vector<8x8xf32>
    %16 = arith.maximumf %14, %15 : vector<8x8xf32>
    %17 = arith.truncf %16 : vector<8x8xf32> to vector<8x8xbf16>
    %c0_12 = arith.constant 0 : index
    %c0_13 = arith.constant 0 : index
    %18 = vector.load %arg6[%c0_12, %c0_13] : memref<8x8xbf16, #tpu.memory_space<vmem>>, vector<8x8xbf16>
    %cst_14 = arith.constant dense<0.000000e+00> : vector<8x8xf32>
    %19 = tpu.matmul %17, %18, %cst_14 {dimension_numbers = #tpu.dot_dimension_numbers<[1], [0], [0], [1], [0, 0, 1, 1], [], []>} : vector<8x8xbf16>, vector<8x8xbf16>, vector<8x8xf32> -> vector<8x8xf32>
    %c0_15 = arith.constant 0 : index
    %c0_16 = arith.constant 0 : index
    %20 = vector.load %arg7[%c0_15, %c0_16] : memref<1x8xf32, #tpu.memory_space<vmem>>, vector<1x8xf32>
    %21 = vector.broadcast %20 : vector<1x8xf32> to vector<8x8xf32>
    %22 = arith.addf %19, %21 : vector<8x8xf32>
    %c0_17 = arith.constant 0 : index
    %c0_18 = arith.constant 0 : index
    %23 = vector.load %arg8[%c0_17, %c0_18] : memref<8x8xf32, #tpu.memory_space<vmem>>, vector<8x8xf32>
    tpu.vector_store %arg8[%c0_17, %c0_18], %22 {strides = array<i32>} : memref<8x8xf32, #tpu.memory_space<vmem>>, vector<8x8xf32>,
    return
  }
  func.func @transform_0(%arg0: i32) -> (i32, i32) {
    %c0_i32 = arith.constant 0 : i32
    %c0_i32_0 = arith.constant 0 : i32
    return %arg0, %c0_i32 : i32, i32
  }
  func.func @transform_1(%arg0: i32) -> (i32, i32) {
    %c0_i32 = arith.constant 0 : i32
    %c0_i32_0 = arith.constant 0 : i32
    %c0_i32_1 = arith.constant 0 : i32
    return %c0_i32, %c0_i32_0 : i32, i32
  }
  func.func @transform_2(%arg0: i32) -> (i32, i32) {
    %c0_i32 = arith.constant 0 : i32
    %c0_i32_0 = arith.constant 0 : i32
    %c0_i32_1 = arith.constant 0 : i32
    return %c0_i32, %c0_i32_0 : i32, i32
  }
  func.func @transform_3(%arg0: i32) -> (i32, i32) {
    %c0_i32 = arith.constant 0 : i32
    %c0_i32_0 = arith.constant 0 : i32
    %c0_i32_1 = arith.constant 0 : i32
    return %c0_i32, %c0_i32_0 : i32, i32
  }
  func.func @transform_4(%arg0: i32) -> (i32, i32) {
    %c0_i32 = arith.constant 0 : i32
    %c0_i32_0 = arith.constant 0 : i32
    %c0_i32_1 = arith.constant 0 : i32
    return %c0_i32, %c0_i32_0 : i32, i32
  }
  func.func @transform_5(%arg0: i32) -> (i32, i32) {
    %c0_i32 = arith.constant 0 : i32
    %c0_i32_0 = arith.constant 0 : i32
    %c0_i32_1 = arith.constant 0 : i32
    return %c0_i32, %c0_i32_0 : i32, i32
  }
  func.func @transform_6(%arg0: i32) -> (i32, i32) {
    %c0_i32 = arith.constant 0 : i32
    %c0_i32_0 = arith.constant 0 : i32
    %c0_i32_1 = arith.constant 0 : i32
    return %c0_i32, %c0_i32_0 : i32, i32
  }
  func.func @transform_7(%arg0: i32) -> (i32, i32) {
    %c0_i32 = arith.constant 0 : i32
    %c0_i32_0 = arith.constant 0 : i32
    return %arg0, %c0_i32 : i32, i32
  }
}

</mosaic_0001>

<llo_original>
// kernel: tpu_custom_call.1
$region0: #{tpu_custom_call.1}
  #allocation0 [shape = 'u32[]', space=smem, size = 0x4, offset = 0x4, fixed_abs, tag = 'smem constant byte address 0x4 - core index']
  #allocation1 [shape = 'u32[144,128]{1,0:T(1,128)}', space=vmem, size = 0x12000, scoped, tag = 'internal scratch']
  %s0 = inlined_call_operand.vmem [shape: f32[8,32], index: 0, kind: input, shape index: {}]
  %s1 = inlined_call_operand.vmem [shape: bf16[32,16], index: 1, kind: input, shape index: {}]
  %s2 = inlined_call_operand.vmem [shape: f32[1,16], index: 2, kind: input, shape index: {}]
  %s3 = inlined_call_operand.vmem [shape: bf16[16,8], index: 3, kind: input, shape index: {}]
  %s4 = inlined_call_operand.vmem [shape: f32[1,8], index: 4, kind: input, shape index: {}]
  %s5 = inlined_call_operand.vmem [shape: bf16[8,8], index: 5, kind: input, shape index: {}]
  %s6 = inlined_call_operand.vmem [shape: f32[1,8], index: 6, kind: input, shape index: {}]
  %s7 = inlined_call_operand.hbm [shape: f32[8,8], index: 7, kind: output, shape index: {}]
  %s8 = sld [smem:[#allocation0]]
  $region38: #{tpu_custom_call.1} parent=0
    _
  %s10 = ssub.s32 1, %s8
  %s11 = scalar_select 0, %s10, %s8
  $region1: #{tpu_custom_call.1} parent=0
    #allocation2 [shape = 'u8[4096]{0}', space=vmem, size = 0x1000, scoped, tag = 'output window, operand 0, single buffered']
    #allocation3 [shape = 's32[1]{0}', space=sflag, size = 0x4, scoped, tag = 'scoped memory for tpu_custom_call.1']
    %12 = vsyncpa [#allocation3], 0
    // Predicated region
    $region2: #{tpu_custom_call.1} parent=1 // pred_check
      _
    $region3: #{tpu_custom_call.1} parent=1 // pred_check_branch
      %14 = sbr.rel (0) target = $region5
    $region4: #{tpu_custom_call.1} parent=1 // pred_region
      _
    $region5: #{tpu_custom_call.1} parent=1 // pred_fallthru
      _
    // Predicated region
    $region6: #{tpu_custom_call.1} parent=1 // pred_check
      _
    $region7: #{tpu_custom_call.1} parent=1 // pred_check_branch
      %16 = sbr.rel (0) target = $region9
    $region8: #{tpu_custom_call.1} parent=1 // pred_region
      _
    $region9: #{tpu_custom_call.1} parent=1 // pred_fallthru
      _
    // Predicated region
    $region10: #{tpu_custom_call.1} parent=1 // pred_check
      _
    $region11: #{tpu_custom_call.1} parent=1 // pred_check_branch
      %18 = sbr.rel (0) target = $region13
    $region12: #{tpu_custom_call.1} parent=1 // pred_region
      _
    $region13: #{tpu_custom_call.1} parent=1 // pred_fallthru
      _
    // Predicated region
    $region14: #{tpu_custom_call.1} parent=1 // pred_check
      _
    $region15: #{tpu_custom_call.1} parent=1 // pred_check_branch
      %20 = sbr.rel (0) target = $region17
    $region16: #{tpu_custom_call.1} parent=1 // pred_region
      _
    $region17: #{tpu_custom_call.1} parent=1 // pred_fallthru
      _
    // Predicated region
    $region18: #{tpu_custom_call.1} parent=1 // pred_check
      _
    $region19: #{tpu_custom_call.1} parent=1 // pred_check_branch
      %22 = sbr.rel (0) target = $region21
    $region20: #{tpu_custom_call.1} parent=1 // pred_region
      _
    $region21: #{tpu_custom_call.1} parent=1 // pred_fallthru
      _
    // Predicated region
    $region22: #{tpu_custom_call.1} parent=1 // pred_check
      _
    $region23: #{tpu_custom_call.1} parent=1 // pred_check_branch
      %24 = sbr.rel (0) target = $region25
    $region24: #{tpu_custom_call.1} parent=1 // pred_region
      _
    $region25: #{tpu_custom_call.1} parent=1 // pred_fallthru
      _
    // Predicated region
    $region26: #{tpu_custom_call.1} parent=1 // pred_check
      _
    $region27: #{tpu_custom_call.1} parent=1 // pred_check_branch
      %26 = sbr.rel (0) target = $region29
    $region28: #{tpu_custom_call.1} parent=1 // pred_region
      _
    $region29: #{tpu_custom_call.1} parent=1 // pred_fallthru
      _
    %v28 = vld [vmem:[%s0] sm:$0xff]
    %v29 = vpack.c.bf16 %v28, %v28
    %v30 = vld [vmem:[%s1] sm:$0xf]
    %v31 = vld [vmem:[%s1 + $0x4] sm:$0xf]
    %v32 = vld [vmem:[%s1 + $0x8] sm:$0xf]
    %v33 = vld [vmem:[%s1 + $0xc] sm:$0xf]
    %v34 = vld [vmem:[%s2] sm:$0x1]
    %v36 = vlaneseq
    %v37 = vshrl.u32 %v36, 7
    %v38 = vsub.s32 0, %v37
    %v39 = vrot.slane %v34, %v38
    %v45 = vunpack.c.l.b16 %v30
    %v46 = vunpack.c.l.b16 %v31
    %v47 = vunpack.c.l.b16 %v32
    %v48 = vunpack.c.l.b16 %v33
    %v49 = vpack.c.b16 %v46, %v45
    %v50 = vpack.c.b16 %v48, %v47
    %vm53 = vcmask 261120
    %v55 = vsel %vm53, %v29, 0
    %57 = vmatprep.subr.bf16.mxu0 0
    %58 = vmatpush1.bf16.msra.mxu0 %v49
    %59 = vmatprep.subr.bf16.mxu0 0
    %60 = vmatpush1.bf16.msra.mxu0 %v50
    %61 = vmatprep.subr.bf16.mxu0 0
    %62 = vmatpush1.bf16.msra.mxu0 0
    %63 = vmatprep.subr.bf16.mxu0 0
    %64 = vmatpush1.bf16.msra.mxu0 0
    %65 = vmatprep.subr.bf16.mxu0 0
    %66 = vmatpush1.bf16.msra.mxu0 0
    %67 = vmatprep.subr.bf16.mxu0 0
    %68 = vmatpush1.bf16.msra.mxu0 0
    %69 = vmatprep.subr.bf16.mxu0 0
    %70 = vmatpush1.bf16.msra.mxu0 0
    %71 = vmatprep.subr.bf16.mxu0 0
    %72 = vmatpush1.bf16.msra.mxu0 0
    %73 = vmatprep.subr.bf16.mxu0 0
    %74 = vmatpush1.bf16.msra.mxu0 0
    %75 = vmatprep.subr.bf16.mxu0 0
    %76 = vmatpush1.bf16.msra.mxu0 0
    %77 = vmatprep.subr.bf16.mxu0 0
    %78 = vmatpush1.bf16.msra.mxu0 0
    %79 = vmatprep.subr.bf16.mxu0 0
    %80 = vmatpush1.bf16.msra.mxu0 0
    %81 = vmatprep.subr.bf16.mxu0 0
    %82 = vmatpush1.bf16.msra.mxu0 0
    %83 = vmatprep.subr.bf16.mxu0 0
    %84 = vmatpush1.bf16.msra.mxu0 0
    %85 = vmatprep.subr.bf16.mxu0 0
    %86 = vmatpush1.bf16.msra.mxu0 0
    %87 = vmatprep.subr.bf16.mxu0 0
    %88 = vmatpush1.bf16.msra.mxu0 0
    %89 = vmatprep.mubr.bf16.mxu0 0
    %90 = vmatmul.mubr.bf16.gmra.mrb[0].mxu0 %v55
    %v91 = vpop.f32.mrb[0].mxu0
    %v92 = vadd.f32 %v39, %v91
    %v93 = vpop.f32.mrb[0].mxu0
    %v94 = vpop.f32.mrb[0].mxu0
    %v95 = vpop.f32.mrb[0].mxu0
    %96 = vdwg.mxu0
    %v97 = vmax.f32 %v92, 0.0
    %v98 = vpack.c.bf16 %v97, %v97
    %v99 = vld [vmem:[%s3] sm:$0xf]
    %v100 = vld [vmem:[%s3 + $0x4] sm:$0xf]
    %v101 = vld [vmem:[%s4] sm:$0x1]
    %v103 = vlaneseq
    %v104 = vshrl.u32 %v103, 7
    %v105 = vsub.s32 0, %v104
    %v106 = vrot.slane %v101, %v105
    %v110 = vunpack.c.l.b16 %v99
    %v111 = vunpack.c.l.b16 %v100
    %v112 = vpack.c.b16 %v111, %v110
    %vm114 = vcmask 130048
    %v116 = vsel %vm114, %v98, 0
    %118 = vmatprep.subr.bf16.mxu0 0
    %119 = vmatpush1.bf16.msra.mxu0 %v112
    %120 = vmatprep.subr.bf16.mxu0 0
    %121 = vmatpush1.bf16.msra.mxu0 0
    %122 = vmatprep.subr.bf16.mxu0 0
    %123 = vmatpush1.bf16.msra.mxu0 0
    %124 = vmatprep.subr.bf16.mxu0 0
    %125 = vmatpush1.bf16.msra.mxu0 0
    %126 = vmatprep.subr.bf16.mxu0 0
    %127 = vmatpush1.bf16.msra.mxu0 0
    %128 = vmatprep.subr.bf16.mxu0 0
    %129 = vmatpush1.bf16.msra.mxu0 0
    %130 = vmatprep.subr.bf16.mxu0 0
    %131 = vmatpush1.bf16.msra.mxu0 0
    %132 = vmatprep.subr.bf16.mxu0 0
    %133 = vmatpush1.bf16.msra.mxu0 0
    %134 = vmatprep.subr.bf16.mxu0 0
    %135 = vmatpush1.bf16.msra.mxu0 0
    %136 = vmatprep.subr.bf16.mxu0 0
    %137 = vmatpush1.bf16.msra.mxu0 0
    %138 = vmatprep.subr.bf16.mxu0 0
    %139 = vmatpush1.bf16.msra.mxu0 0
    %140 = vmatprep.subr.bf16.mxu0 0
    %141 = vmatpush1.bf16.msra.mxu0 0
    %142 = vmatprep.subr.bf16.mxu0 0
    %143 = vmatpush1.bf16.msra.mxu0 0
    %144 = vmatprep.subr.bf16.mxu0 0
    %145 = vmatpush1.bf16.msra.mxu0 0
    %146 = vmatprep.subr.bf16.mxu0 0
    %147 = vmatpush1.bf16.msra.mxu0 0
    %148 = vmatprep.subr.bf16.mxu0 0
    %149 = vmatpush1.bf16.msra.mxu0 0
    %150 = vmatprep.mubr.bf16.mxu0 0
    %151 = vmatmul.mubr.bf16.gmra.mrb[0].mxu0 %v116
    %v152 = vpop.f32.mrb[0].mxu0
    %v153 = vadd.f32 %v106, %v152
    %v154 = vpop.f32.mrb[0].mxu0
    %v155 = vpop.f32.mrb[0].mxu0
    %v156 = vpop.f32.mrb[0].mxu0
    %157 = vdwg.mxu0
    %v158 = vmax.f32 %v153, 0.0
    %v159 = vpack.c.bf16 %v158, %v158
    %v160 = vld [vmem:[%s5] sm:$0xf]
    %v161 = vld [vmem:[%s6] sm:$0x1]
    %v163 = vlaneseq
    %v164 = vshrl.u32 %v163, 7
    %v165 = vsub.s32 0, %v164
    %v166 = vrot.slane %v161, %v165
    %vm168 = vcmask 64512
    %v170 = vsel %vm168, %v159, 0
    %vm172 = vcmask 1043456
    %v174 = vsel %vm172, %v160, 0
    %176 = vmatprep.subr.bf16.mxu0 0
    %177 = vmatpush1.bf16.msra.mxu0 %v174
    %178 = vmatprep.subr.bf16.mxu0 0
    %179 = vmatpush1.bf16.msra.mxu0 0
    %180 = vmatprep.subr.bf16.mxu0 0
    %181 = vmatpush1.bf16.msra.mxu0 0
    %182 = vmatprep.subr.bf16.mxu0 0
    %183 = vmatpush1.bf16.msra.mxu0 0
    %184 = vmatprep.subr.bf16.mxu0 0
    %185 = vmatpush1.bf16.msra.mxu0 0
    %186 = vmatprep.subr.bf16.mxu0 0
    %187 = vmatpush1.bf16.msra.mxu0 0
    %188 = vmatprep.subr.bf16.mxu0 0
    %189 = vmatpush1.bf16.msra.mxu0 0
    %190 = vmatprep.subr.bf16.mxu0 0
    %191 = vmatpush1.bf16.msra.mxu0 0
    %192 = vmatprep.subr.bf16.mxu0 0
    %193 = vmatpush1.bf16.msra.mxu0 0
    %194 = vmatprep.subr.bf16.mxu0 0
    %195 = vmatpush1.bf16.msra.mxu0 0
    %196 = vmatprep.subr.bf16.mxu0 0
    %197 = vmatpush1.bf16.msra.mxu0 0
    %198 = vmatprep.subr.bf16.mxu0 0
    %199 = vmatpush1.bf16.msra.mxu0 0
    %200 = vmatprep.subr.bf16.mxu0 0
    %201 = vmatpush1.bf16.msra.mxu0 0
    %202 = vmatprep.subr.bf16.mxu0 0
    %203 = vmatpush1.bf16.msra.mxu0 0
    %204 = vmatprep.subr.bf16.mxu0 0
    %205 = vmatpush1.bf16.msra.mxu0 0
    %206 = vmatprep.subr.bf16.mxu0 0
    %207 = vmatpush1.bf16.msra.mxu0 0
    %208 = vmatprep.mubr.bf16.mxu0 0
    %209 = vmatmul.mubr.bf16.gmra.mrb[0].mxu0 %v170
    %v210 = vpop.f32.mrb[0].mxu0
    %v211 = vadd.f32 %v166, %v210
    %v212 = vpop.f32.mrb[0].mxu0
    %v213 = vpop.f32.mrb[0].mxu0
    %v214 = vpop.f32.mrb[0].mxu0
    %215 = vdwg.mxu0
    %216 = vst.msk [vmem:[#allocation2] sm:$0xff] %vm168, %v211
    // Predicated region
    $region30: #{tpu_custom_call.1} parent=1 // pred_check
      _
    $region31: #{tpu_custom_call.1} parent=1 // pred_check_branch
      %218 = sbr.rel (0) target = $region33
    $region32: #{tpu_custom_call.1} parent=1 // pred_region
      %s220 = ssub.s32 128, 128
      %221 = vsyncadd [#allocation3], %s220
      %s223 = sshll.u32 [#allocation2], 4
      %s224 = int_to_ptr.vmem [resolvable:$true] %s223
      %226 = dma.vmem_to_hbm [thread:$0]  %s224, 128, %s7, [#allocation3]
    $region33: #{tpu_custom_call.1} parent=1 // pred_fallthru
      _
    // Predicated region
    $region34: #{tpu_custom_call.1} parent=1 // pred_check
      _
    $region35: #{tpu_custom_call.1} parent=1 // pred_check_branch
      %228 = sbr.rel (0) target = $region37
    $region36: #{tpu_custom_call.1} parent=1 // pred_region
      %229 = dma.done [#allocation3], 128
    $region37: #{tpu_custom_call.1} parent=1 // pred_fallthru
      _
    %230 = vsyncpa [#allocation3], 1

</llo_original>
